<compile_context>
chip_gen: v6e
topology: v6e:2x2x1
jax: 0.10.0
libtpu: 0.0.40
codegen_flags: <defaults>
</compile_context>

<pallas_src>
import jax
import jax.numpy as jnp
from jax.experimental import pallas as pl
from jax.experimental.pallas import tpu as pltpu


# Rows per grid step. 256 (multiple of 8) keeps >=2 parallel grid steps on v7x for
# B >= 512 so megacore can split the batch across both TensorCores; on v5e/v6e the
# whole batch fits one step for B <= 256.  Raise (with vmem_limit_bytes) on v5e/v6e
# for very large batches to amortize per-step overhead further.
_MAX_BATCH_BLOCK = 256


def attn_kernel(hid_ref, enc_ref, wh_ref, we_ref, b_ref, v_ref, out_ref):
    # hid_ref: (Bb, Dh)    f32   last-timestep hidden states of this batch block
    # enc_ref: (Bb*S, De)  f32   encoder outputs, batch-major flattened rows
    # wh_ref : (Dh, H)     f32   Linear weight, "hidden" half, transposed
    # we_ref : (De, H)     f32   Linear weight, "encoder" half, transposed
    # b_ref  : (1, H)      f32   Linear bias
    # v_ref  : (1, H)      f32   attention vector v
    # out_ref: (Bb, S)     f32   softmax attention weights
    Bb, S = out_ref.shape
    H = we_ref.shape[1]

    # Linear(cat(hidden, enc)) == enc @ We + hidden @ Wh + b   (hidden broadcast over S).
    eproj = jnp.dot(enc_ref[...], we_ref[...],
                    preferred_element_type=jnp.float32)              # (Bb*S, H)
    hproj = jnp.dot(hid_ref[...], wh_ref[...],
                    preferred_element_type=jnp.float32)              # (Bb, H)
    pre = eproj.reshape(Bb, S, H) + hproj[:, None, :] + b_ref[...]   # (Bb, S, H)
    e = jnp.tanh(pre)                                                # f32 elementwise (EUP)

    # scores[b, s] = sum_h v[h] * e[b, s, h]  -> VPU multiply + lane reduce (MXU stays free).
    scores = jnp.sum(e * v_ref[...], axis=-1)                        # (Bb, S)

    # Softmax over the sequence axis -- exact normalization so rows sum to 1 to f32
    # precision (approx reciprocal was the previous correctness failure).
    m = jnp.max(scores, axis=-1, keepdims=True)
    ex = jnp.exp(scores - m)
    out_ref[...] = (ex / jnp.sum(ex, axis=-1, keepdims=True)).astype(out_ref.dtype)


def prepare_attention_params(W, b, v, dh):
    """Split/transpose the Linear weight once (hoisted out of the hot path)."""
    Wh = jnp.asarray(W[:, :dh].T, jnp.float32)         # (Dh, H) "hidden" half
    We = jnp.asarray(W[:, dh:].T, jnp.float32)         # (De, H) "encoder" half
    b2 = jnp.asarray(b, jnp.float32).reshape(1, -1)    # (1, H)
    v2 = jnp.asarray(v, jnp.float32).reshape(1, -1)    # (1, H)
    return Wh, We, b2, v2


@jax.jit
def attention_forward(hidden, encoder_outputs, Wh, We, b2, v2):
    """hidden: (B,1,Dh), encoder_outputs: (B,S,De); params from prepare_attention_params."""
    B, _, Dh = hidden.shape
    _, S, De = encoder_outputs.shape
    H = Wh.shape[1]

    Bb = min(B, _MAX_BATCH_BLOCK)          # Bb == B (<=256) or 256 (multiple of 8)
    num_blocks = pl.cdiv(B, Bb)            # last block may be partial; Pallas masks it

    hid2d = hidden[:, 0, :]                       # (B, Dh)   f32, free slice
    enc2d = encoder_outputs.reshape(B * S, De)    # (B*S, De) f32, free bitcast reshape

    cost = pl.CostEstimate(
        flops=2 * B * S * De * H + 2 * B * Dh * H + 6 * B * S * H,
        transcendentals=B * S * H + B * S,
        bytes_accessed=4 * (B * S * De + B * Dh + (Dh + De) * H + 2 * H + B * S),
    )

    out = pl.pallas_call(
        attn_kernel,
        out_shape=jax.ShapeDtypeStruct((B, S), jnp.float32),
        grid_spec=pltpu.PrefetchScalarGridSpec(
            num_scalar_prefetch=0,
            grid=(num_blocks,),
            in_specs=[
                pl.BlockSpec((Bb, Dh), lambda i: (i, 0)),
                pl.BlockSpec((Bb * S, De), lambda i: (i, 0)),
                pl.BlockSpec((Dh, H), lambda i: (0, 0)),
                pl.BlockSpec((De, H), lambda i: (0, 0)),
                pl.BlockSpec((1, H), lambda i: (0, 0)),
                pl.BlockSpec((1, H), lambda i: (0, 0)),
            ],
            out_specs=pl.BlockSpec((Bb, S), lambda i: (i, 0)),
        ),
        compiler_params=pltpu.CompilerParams(
            dimension_semantics=("parallel",),
            vmem_limit_bytes=32 << 20,
        ),
        cost_estimate=cost,
    )(hid2d, enc2d, Wh, We, b2, v2)

    return out.reshape(B, 1, S)


def attention_reference(hidden, encoder_outputs, W, b, v):
    """Pure-JAX f32 reference mirroring the PyTorch forward exactly."""
    B, _, _ = hidden.shape
    S = encoder_outputs.shape[1]
    hid_rep = jnp.repeat(hidden, S, axis=1)                       # (B,S,Dh)
    cat = jnp.concatenate([hid_rep, encoder_outputs], axis=2)     # (B,S,Dh+De)
    e = jnp.tanh(jnp.einsum("bsk,hk->bsh", cat, W) + b)           # (B,S,H)
    e_t = jnp.swapaxes(e, 1, 2)                                   # (B,H,S)
    vv = jnp.broadcast_to(v[None, None, :], (B, 1, v.shape[0]))   # (B,1,H)
    scores = jnp.einsum("bih,bhs->bis", vv, e_t)[:, 0, :]         # (B,S)
    return jax.nn.softmax(scores, axis=1)[:, None, :]             # (B,1,S)


if __name__ == "__main__":
    # Shapes consistent with the module: hidden_size=32, bidirectional=True
    H = 32
    bidirectional = True
    Dh = De = 2 * H if bidirectional else H
    in_features = Dh + De          # 4H (bidirectional), matching the PyTorch Linear
    B, S = 2, 8

    key = jax.random.PRNGKey(0)
    k1, k2, k3, k4, k5 = jax.random.split(key, 5)

    # Deterministic parameter init (shapes from the module's __init__).
    bound = 1.0 / jnp.sqrt(in_features)
    W = jax.random.uniform(k1, (H, in_features), jnp.float32, -bound, bound)  # attn.weight
    b = jax.random.uniform(k2, (H,), jnp.float32, -bound, bound)              # attn.bias
    v = jax.random.uniform(k3, (H,), jnp.float32, 0.0, 1.0)                   # torch.rand(H)

    # Example inputs.
    hidden = jax.random.normal(k4, (B, 1, Dh), jnp.float32)
    encoder_outputs = jax.random.normal(k5, (B, S, De), jnp.float32)

    # Weight preprocessing done once, outside the hot path.
    Wh, We, b2, v2 = prepare_attention_params(W, b, v, Dh)

    out = attention_forward(hidden, encoder_outputs, Wh, We, b2, v2)
    out = jax.block_until_ready(out)

    ref = attention_reference(hidden, encoder_outputs, W, b, v)
    assert out.shape == (B, 1, S)
    # Default-precision MXU matmuls -> modest tolerance vs the einsum reference.
    assert jnp.allclose(out, ref, atol=2e-2, rtol=2e-2)
    # Exact softmax normalization inside the kernel: rows sum to 1 to f32 precision.
    assert jnp.allclose(jnp.sum(out, axis=-1), 1.0, atol=1e-3)

    print("KERNEL_OK")
</pallas_src>

<mosaic_0001>
module attributes {stable_mosaic.version = 11 : i64} {
  func.func @attn_kernel(%arg0: i32, %arg1: memref<2x64xf32, #tpu.memory_space<vmem>>, %arg2: memref<16x64xf32, #tpu.memory_space<vmem>>, %arg3: memref<64x32xf32, #tpu.memory_space<vmem>>, %arg4: memref<64x32xf32, #tpu.memory_space<vmem>>, %arg5: memref<1x32xf32, #tpu.memory_space<vmem>>, %arg6: memref<1x32xf32, #tpu.memory_space<vmem>>, %arg7: memref<2x8xf32, #tpu.memory_space<vmem>>) attributes {dimension_semantics = [#tpu.dimension_semantics<parallel>], iteration_bounds = array<i64: 1>, scalar_prefetch = 0 : i64, scratch_operands = 0 : i64, tpu.core_type = #tpu.core_type<tc>, window_params = [{transform_indices = @transform_0, window_bounds = array<i64: 2, 64>}, {transform_indices = @transform_1, window_bounds = array<i64: 16, 64>}, {pipeline_mode = #tpu.pipeline_mode<synchronous>, transform_indices = @transform_2, window_bounds = array<i64: 64, 32>}, {pipeline_mode = #tpu.pipeline_mode<synchronous>, transform_indices = @transform_3, window_bounds = array<i64: 64, 32>}, {pipeline_mode = #tpu.pipeline_mode<synchronous>, transform_indices = @transform_4, window_bounds = array<i64: 1, 32>}, {pipeline_mode = #tpu.pipeline_mode<synchronous>, transform_indices = @transform_5, window_bounds = array<i64: 1, 32>}, {transform_indices = @transform_6, window_bounds = array<i64: 2, 8>}]} {
    %c0 = arith.constant 0 : index
    %c0_0 = arith.constant 0 : index
    %0 = vector.load %arg2[%c0, %c0_0] : memref<16x64xf32, #tpu.memory_space<vmem>>, vector<16x64xf32>
    %c0_1 = arith.constant 0 : index
    %c0_2 = arith.constant 0 : index
    %1 = vector.load %arg4[%c0_1, %c0_2] : memref<64x32xf32, #tpu.memory_space<vmem>>, vector<64x32xf32>
    %cst = arith.constant dense<0.000000e+00> : vector<16x32xf32>
    %2 = tpu.matmul %0, %1, %cst {dimension_numbers = #tpu.dot_dimension_numbers<[1], [0], [0], [1], [0, 0, 1, 1], [], []>} : vector<16x64xf32>, vector<64x32xf32>, vector<16x32xf32> -> vector<16x32xf32>
    %c0_3 = arith.constant 0 : index
    %c0_4 = arith.constant 0 : index
    %3 = vector.load %arg1[%c0_3, %c0_4] : memref<2x64xf32, #tpu.memory_space<vmem>>, vector<2x64xf32>
    %c0_5 = arith.constant 0 : index
    %c0_6 = arith.constant 0 : index
    %4 = vector.load %arg3[%c0_5, %c0_6] : memref<64x32xf32, #tpu.memory_space<vmem>>, vector<64x32xf32>
    %cst_7 = arith.constant dense<0.000000e+00> : vector<2x32xf32>
    %5 = tpu.matmul %3, %4, %cst_7 {dimension_numbers = #tpu.dot_dimension_numbers<[1], [0], [0], [1], [0, 0, 1, 1], [], []>} : vector<2x64xf32>, vector<64x32xf32>, vector<2x32xf32> -> vector<2x32xf32>
    %6 = vector.shape_cast %2 : vector<16x32xf32> to vector<2x8x32xf32>
    %7 = vector.shape_cast %5 : vector<2x32xf32> to vector<2x1x32xf32>
    %8 = vector.broadcast %7 : vector<2x1x32xf32> to vector<2x8x32xf32>
    %9 = arith.addf %6, %8 : vector<2x8x32xf32>
    %c0_8 = arith.constant 0 : index
    %c0_9 = arith.constant 0 : index
    %10 = vector.load %arg5[%c0_8, %c0_9] : memref<1x32xf32, #tpu.memory_space<vmem>>, vector<1x32xf32>
    %11 = vector.shape_cast %10 : vector<1x32xf32> to vector<1x1x32xf32>
    %12 = vector.broadcast %11 : vector<1x1x32xf32> to vector<2x8x32xf32>
    %13 = arith.addf %9, %12 : vector<2x8x32xf32>
    %14 = math.tanh %13 : vector<2x8x32xf32>
    %c0_10 = arith.constant 0 : index
    %c0_11 = arith.constant 0 : index
    %15 = vector.load %arg6[%c0_10, %c0_11] : memref<1x32xf32, #tpu.memory_space<vmem>>, vector<1x32xf32>
    %16 = vector.shape_cast %15 : vector<1x32xf32> to vector<1x1x32xf32>
    %17 = vector.broadcast %16 : vector<1x1x32xf32> to vector<2x8x32xf32>
    %18 = arith.mulf %14, %17 : vector<2x8x32xf32>
    %cst_12 = arith.constant dense<0.000000e+00> : vector<2x8xf32>
    %19 = vector.multi_reduction <add>, %18, %cst_12 [2] : vector<2x8x32xf32> to vector<2x8xf32>
    %cst_13 = arith.constant dense<0xFF800000> : vector<2xf32>
    %20 = vector.multi_reduction <maximumf>, %19, %cst_13 [1] : vector<2x8xf32> to vector<2xf32>
    %21 = vector.shape_cast %20 : vector<2xf32> to vector<2x1xf32>
    %22 = vector.broadcast %21 : vector<2x1xf32> to vector<2x8xf32>
    %23 = arith.subf %19, %22 : vector<2x8xf32>
    %24 = math.exp %23 : vector<2x8xf32>
    %cst_14 = arith.constant dense<0.000000e+00> : vector<2xf32>
    %25 = vector.multi_reduction <add>, %24, %cst_14 [1] : vector<2x8xf32> to vector<2xf32>
    %26 = vector.shape_cast %25 : vector<2xf32> to vector<2x1xf32>
    %27 = vector.broadcast %26 : vector<2x1xf32> to vector<2x8xf32>
    %28 = arith.divf %24, %27 : vector<2x8xf32>
    %c0_15 = arith.constant 0 : index
    %c0_16 = arith.constant 0 : index
    %29 = vector.load %arg7[%c0_15, %c0_16] : memref<2x8xf32, #tpu.memory_space<vmem>>, vector<2x8xf32>
    tpu.vector_store %arg7[%c0_15, %c0_16], %28 {strides = array<i32>} : memref<2x8xf32, #tpu.memory_space<vmem>>, vector<2x8xf32>,
    return
  }
  func.func @transform_0(%arg0: i32) -> (i32, i32) {
    %c0_i32 = arith.constant 0 : i32
    %c0_i32_0 = arith.constant 0 : i32
    return %arg0, %c0_i32 : i32, i32
  }
  func.func @transform_1(%arg0: i32) -> (i32, i32) {
    %c0_i32 = arith.constant 0 : i32
    %c0_i32_0 = arith.constant 0 : i32
    return %arg0, %c0_i32 : i32, i32
  }
  func.func @transform_2(%arg0: i32) -> (i32, i32) {
    %c0_i32 = arith.constant 0 : i32
    %c0_i32_0 = arith.constant 0 : i32
    %c0_i32_1 = arith.constant 0 : i32
    return %c0_i32, %c0_i32_0 : i32, i32
  }
  func.func @transform_3(%arg0: i32) -> (i32, i32) {
    %c0_i32 = arith.constant 0 : i32
    %c0_i32_0 = arith.constant 0 : i32
    %c0_i32_1 = arith.constant 0 : i32
    return %c0_i32, %c0_i32_0 : i32, i32
  }
  func.func @transform_4(%arg0: i32) -> (i32, i32) {
    %c0_i32 = arith.constant 0 : i32
    %c0_i32_0 = arith.constant 0 : i32
    %c0_i32_1 = arith.constant 0 : i32
    return %c0_i32, %c0_i32_0 : i32, i32
  }
  func.func @transform_5(%arg0: i32) -> (i32, i32) {
    %c0_i32 = arith.constant 0 : i32
    %c0_i32_0 = arith.constant 0 : i32
    %c0_i32_1 = arith.constant 0 : i32
    return %c0_i32, %c0_i32_0 : i32, i32
  }
  func.func @transform_6(%arg0: i32) -> (i32, i32) {
    %c0_i32 = arith.constant 0 : i32
    %c0_i32_0 = arith.constant 0 : i32
    return %arg0, %c0_i32 : i32, i32
  }
}

</mosaic_0001>

<llo_original>
// kernel: attention_forward.1
$region0: #{attention_forward.1}
  #allocation0 [shape = 'u32[]', space=smem, size = 0x4, offset = 0x4, fixed_abs, tag = 'smem constant byte address 0x4 - core index']
  #allocation1 [shape = 'u32[144,128]{1,0:T(1,128)}', space=vmem, size = 0x12000, scoped, tag = 'internal scratch']
  %s0 = inlined_call_operand.vmem [shape: f32[2,64], index: 0, kind: input, shape index: {}]
  %s1 = inlined_call_operand.vmem [shape: f32[16,64], index: 1, kind: input, shape index: {}]
  %s2 = inlined_call_operand.vmem [shape: f32[64,32], index: 2, kind: input, shape index: {}]
  %s3 = inlined_call_operand.vmem [shape: f32[64,32], index: 3, kind: input, shape index: {}]
  %s4 = inlined_call_operand.vmem [shape: f32[1,32], index: 4, kind: input, shape index: {}]
  %s5 = inlined_call_operand.vmem [shape: f32[1,32], index: 5, kind: input, shape index: {}]
  %s6 = inlined_call_operand.hbm [shape: f32[2,8], index: 6, kind: output, shape index: {}]
  %s7 = sld [smem:[#allocation0]]
  $region34: #{attention_forward.1} parent=0
    _
  %s9 = ssub.s32 1, %s7
  %s10 = scalar_select 0, %s9, %s7
  $region1: #{attention_forward.1} parent=0
    #allocation2 [shape = 'u8[1024]{0}', space=vmem, size = 0x400, scoped, tag = 'output window, operand 0, single buffered']
    #allocation3 [shape = 's32[1]{0}', space=sflag, size = 0x4, scoped, tag = 'scoped memory for attention_forward.1']
    %11 = vsyncpa [#allocation3], 0
    // Predicated region
    $region2: #{attention_forward.1} parent=1 // pred_check
      _
    $region3: #{attention_forward.1} parent=1 // pred_check_branch
      %13 = sbr.rel (0) target = $region5
    $region4: #{attention_forward.1} parent=1 // pred_region
      _
    $region5: #{attention_forward.1} parent=1 // pred_fallthru
      _
    // Predicated region
    $region6: #{attention_forward.1} parent=1 // pred_check
      _
    $region7: #{attention_forward.1} parent=1 // pred_check_branch
      %15 = sbr.rel (0) target = $region9
    $region8: #{attention_forward.1} parent=1 // pred_region
      _
    $region9: #{attention_forward.1} parent=1 // pred_fallthru
      _
    // Predicated region
    $region10: #{attention_forward.1} parent=1 // pred_check
      _
    $region11: #{attention_forward.1} parent=1 // pred_check_branch
      %17 = sbr.rel (0) target = $region13
    $region12: #{attention_forward.1} parent=1 // pred_region
      _
    $region13: #{attention_forward.1} parent=1 // pred_fallthru
      _
    // Predicated region
    $region14: #{attention_forward.1} parent=1 // pred_check
      _
    $region15: #{attention_forward.1} parent=1 // pred_check_branch
      %19 = sbr.rel (0) target = $region17
    $region16: #{attention_forward.1} parent=1 // pred_region
      _
    $region17: #{attention_forward.1} parent=1 // pred_fallthru
      _
    // Predicated region
    $region18: #{attention_forward.1} parent=1 // pred_check
      _
    $region19: #{attention_forward.1} parent=1 // pred_check_branch
      %21 = sbr.rel (0) target = $region21
    $region20: #{attention_forward.1} parent=1 // pred_region
      _
    $region21: #{attention_forward.1} parent=1 // pred_fallthru
      _
    // Predicated region
    $region22: #{attention_forward.1} parent=1 // pred_check
      _
    $region23: #{attention_forward.1} parent=1 // pred_check_branch
      %23 = sbr.rel (0) target = $region25
    $region24: #{attention_forward.1} parent=1 // pred_region
      _
    $region25: #{attention_forward.1} parent=1 // pred_fallthru
      _
    %v24 = vld [vmem:[%s1] sm:$0xff]
    %v25 = vld [vmem:[%s1 + $0x8] sm:$0xff]
    %v26 = vld [vmem:[%s3] sm:$0xff]
    %v27 = vld [vmem:[%s3 + $0x8] sm:$0xff]
    %v28 = vld [vmem:[%s3 + $0x10] sm:$0xff]
    %v29 = vld [vmem:[%s3 + $0x18] sm:$0xff]
    %v30 = vld [vmem:[%s3 + $0x20] sm:$0xff]
    %v31 = vld [vmem:[%s3 + $0x28] sm:$0xff]
    %v32 = vld [vmem:[%s3 + $0x30] sm:$0xff]
    %v33 = vld [vmem:[%s3 + $0x38] sm:$0xff]
    %vm34 = vcmask 523264
    %v36 = vsel %vm34, %v24, 0
    %v39 = vsel %vm34, %v25, 0
    %41 = vmatprep.subr.mxu0 0.0
    %42 = vmatpush1.msra.mxu0 0.0
    %43 = vmatprep.subr.mxu0 0.0
    %44 = vmatpush1.msra.mxu0 0.0
    %45 = vmatprep.subr.mxu0 0.0
    %46 = vmatpush1.msra.mxu0 0.0
    %47 = vmatprep.subr.mxu0 0.0
    %48 = vmatpush1.msra.mxu0 0.0
    %49 = vmatprep.subr.mxu0 0.0
    %50 = vmatpush1.msra.mxu0 0.0
    %51 = vmatprep.subr.mxu0 0.0
    %52 = vmatpush1.msra.mxu0 0.0
    %53 = vmatprep.subr.mxu0 0.0
    %54 = vmatpush1.msra.mxu0 0.0
    %55 = vmatprep.subr.mxu0 0.0
    %56 = vmatpush1.msra.mxu0 0.0
    %57 = vmatprep.subr.mxu0 0.0
    %58 = vmatpush1.msra.mxu0 %v33
    %59 = vmatprep.subr.mxu0 0.0
    %60 = vmatpush1.msra.mxu0 %v32
    %61 = vmatprep.subr.mxu0 0.0
    %62 = vmatpush1.msra.mxu0 %v31
    %63 = vmatprep.subr.mxu0 0.0
    %64 = vmatpush1.msra.mxu0 %v30
    %65 = vmatprep.subr.mxu0 0.0
    %66 = vmatpush1.msra.mxu0 %v29
    %67 = vmatprep.subr.mxu0 0.0
    %68 = vmatpush1.msra.mxu0 %v28
    %69 = vmatprep.subr.mxu0 0.0
    %70 = vmatpush1.msra.mxu0 %v27
    %71 = vmatprep.subr.mxu0 0.0
    %72 = vmatpush1.msra.mxu0 %v26
    %73 = vmatprep.subr.mxu0 0.0
    %74 = vmatpush2.msra.mxu0 0.0
    %75 = vmatprep.subr.mxu0 0.0
    %76 = vmatpush2.msra.mxu0 0.0
    %77 = vmatprep.subr.mxu0 0.0
    %78 = vmatpush2.msra.mxu0 0.0
    %79 = vmatprep.subr.mxu0 0.0
    %80 = vmatpush2.msra.mxu0 0.0
    %81 = vmatprep.subr.mxu0 0.0
    %82 = vmatpush2.msra.mxu0 0.0
    %83 = vmatprep.subr.mxu0 0.0
    %84 = vmatpush2.msra.mxu0 0.0
    %85 = vmatprep.subr.mxu0 0.0
    %86 = vmatpush2.msra.mxu0 0.0
    %87 = vmatprep.subr.mxu0 0.0
    %88 = vmatpush2.msra.mxu0 0.0
    %89 = vmatprep.subr.mxu0 0.0
    %90 = vmatpush2.msra.mxu0 0.0
    %91 = vmatprep.subr.mxu0 0.0
    %92 = vmatpush2.msra.mxu0 0.0
    %93 = vmatprep.subr.mxu0 0.0
    %94 = vmatpush2.msra.mxu0 0.0
    %95 = vmatprep.subr.mxu0 0.0
    %96 = vmatpush2.msra.mxu0 0.0
    %97 = vmatprep.subr.mxu0 0.0
    %98 = vmatpush2.msra.mxu0 0.0
    %99 = vmatprep.subr.mxu0 0.0
    %100 = vmatpush2.msra.mxu0 0.0
    %101 = vmatprep.subr.mxu0 0.0
    %102 = vmatpush2.msra.mxu0 0.0
    %103 = vmatprep.subr.mxu0 0.0
    %104 = vmatpush2.msra.mxu0 0.0
    %105 = vmatprep.mubr.f32.mxu0 0.0
    %106 = vmatmul.mubr.f32.gmra.mxu0 %v36
    %v107 = vpop.f32.mrf.mxu0
    %v108 = vadd.f32 0.0, %v107
    %v109 = vpop.f32.mrf.mxu0
    %110 = vmatprep.mubr.f32.mxu0 0.0
    %111 = vmatmul.mubr.f32.gmra.mxu0 %v39
    %v112 = vpop.f32.mrf.mxu0
    %v113 = vadd.f32 0.0, %v112
    %v114 = vpop.f32.mrf.mxu0
    %115 = vdwg.mxu0
    %v116 = vld [vmem:[%s0] sm:$0x3]
    %v117 = vld [vmem:[%s2] sm:$0xff]
    %v118 = vld [vmem:[%s2 + $0x8] sm:$0xff]
    %v119 = vld [vmem:[%s2 + $0x10] sm:$0xff]
    %v120 = vld [vmem:[%s2 + $0x18] sm:$0xff]
    %v121 = vld [vmem:[%s2 + $0x20] sm:$0xff]
    %v122 = vld [vmem:[%s2 + $0x28] sm:$0xff]
    %v123 = vld [vmem:[%s2 + $0x30] sm:$0xff]
    %v124 = vld [vmem:[%s2 + $0x38] sm:$0xff]
    %v126 = vsel %vm34, %v116, 0
    %128 = vmatprep.subr.mxu0 0.0
    %129 = vmatpush1.msra.mxu0 0.0
    %130 = vmatprep.subr.mxu0 0.0
    %131 = vmatpush1.msra.mxu0 0.0
    %132 = vmatprep.subr.mxu0 0.0
    %133 = vmatpush1.msra.mxu0 0.0
    %134 = vmatprep.subr.mxu0 0.0
    %135 = vmatpush1.msra.mxu0 0.0
    %136 = vmatprep.subr.mxu0 0.0
    %137 = vmatpush1.msra.mxu0 0.0
    %138 = vmatprep.subr.mxu0 0.0
    %139 = vmatpush1.msra.mxu0 0.0
    %140 = vmatprep.subr.mxu0 0.0
    %141 = vmatpush1.msra.mxu0 0.0
    %142 = vmatprep.subr.mxu0 0.0
    %143 = vmatpush1.msra.mxu0 0.0
    %144 = vmatprep.subr.mxu0 0.0
    %145 = vmatpush1.msra.mxu0 %v124
    %146 = vmatprep.subr.mxu0 0.0
    %147 = vmatpush1.msra.mxu0 %v123
    %148 = vmatprep.subr.mxu0 0.0
    %149 = vmatpush1.msra.mxu0 %v122
    %150 = vmatprep.subr.mxu0 0.0
    %151 = vmatpush1.msra.mxu0 %v121
    %152 = vmatprep.subr.mxu0 0.0
    %153 = vmatpush1.msra.mxu0 %v120
    %154 = vmatprep.subr.mxu0 0.0
    %155 = vmatpush1.msra.mxu0 %v119
    %156 = vmatprep.subr.mxu0 0.0
    %157 = vmatpush1.msra.mxu0 %v118
    %158 = vmatprep.subr.mxu0 0.0
    %159 = vmatpush1.msra.mxu0 %v117
    %160 = vmatprep.subr.mxu0 0.0
    %161 = vmatpush2.msra.mxu0 0.0
    %162 = vmatprep.subr.mxu0 0.0
    %163 = vmatpush2.msra.mxu0 0.0
    %164 = vmatprep.subr.mxu0 0.0
    %165 = vmatpush2.msra.mxu0 0.0
    %166 = vmatprep.subr.mxu0 0.0
    %167 = vmatpush2.msra.mxu0 0.0
    %168 = vmatprep.subr.mxu0 0.0
    %169 = vmatpush2.msra.mxu0 0.0
    %170 = vmatprep.subr.mxu0 0.0
    %171 = vmatpush2.msra.mxu0 0.0
    %172 = vmatprep.subr.mxu0 0.0
    %173 = vmatpush2.msra.mxu0 0.0
    %174 = vmatprep.subr.mxu0 0.0
    %175 = vmatpush2.msra.mxu0 0.0
    %176 = vmatprep.subr.mxu0 0.0
    %177 = vmatpush2.msra.mxu0 0.0
    %178 = vmatprep.subr.mxu0 0.0
    %179 = vmatpush2.msra.mxu0 0.0
    %180 = vmatprep.subr.mxu0 0.0
    %181 = vmatpush2.msra.mxu0 0.0
    %182 = vmatprep.subr.mxu0 0.0
    %183 = vmatpush2.msra.mxu0 0.0
    %184 = vmatprep.subr.mxu0 0.0
    %185 = vmatpush2.msra.mxu0 0.0
    %186 = vmatprep.subr.mxu0 0.0
    %187 = vmatpush2.msra.mxu0 0.0
    %188 = vmatprep.subr.mxu0 0.0
    %189 = vmatpush2.msra.mxu0 0.0
    %190 = vmatprep.subr.mxu0 0.0
    %191 = vmatpush2.msra.mxu0 0.0
    %192 = vmatprep.mubr.f32.mxu0 0.0
    %193 = vmatmul.mubr.f32.gmra.mxu0 %v126
    %v194 = vpop.f32.mrf.mxu0
    %v195 = vadd.f32 0.0, %v194
    %v196 = vpop.f32.mrf.mxu0
    %197 = vdwg.mxu0
    %v200 = vunpack.c.l.s4 1966171168
    %v201 = vunpack.c.0.s8 %v200
    %v202 = vlaneseq
    %v203 = vshrl.u32 %v202, 7
    %v204 = vsub.s32 %v201, %v203
    %v205 = vrot.slane %v195, %v204
    %v206 = vcombine.high %v205, %v205
    %v208 = vunpack.c.l.s4 1966171168
    %v209 = vunpack.c.0.s8 %v208
    %v210 = vlaneseq
    %v211 = vshrl.u32 %v210, 7
    %v212 = vsub.s32 %v209, %v211
    %v213 = vrot.slane %v205, %v212
    %v215 = vunpack.c.l.s4 1966171168
    %v216 = vunpack.c.0.s8 %v215
    %v217 = vlaneseq
    %v218 = vshrl.u32 %v217, 7
    %v219 = vsub.s32 %v216, %v218
    %v220 = vrot.slane %v206, %v219
    %v221 = vlaneseq
    %v222 = vshrl.u32 %v221, 7
    %v223 = vsub.s32 0, %v222
    %v224 = vrot.slane %v213, %v223
    %v225 = vlaneseq
    %v226 = vshrl.u32 %v225, 7
    %v227 = vsub.s32 0, %v226
    %v228 = vrot.slane %v220, %v227
    %v231 = vadd.f32 %v108, %v224
    %v232 = vadd.f32 %v113, %v228
    %v233 = vld [vmem:[%s4] sm:$0x1]
    %v235 = vlaneseq
    %v236 = vshrl.u32 %v235, 7
    %v237 = vsub.s32 0, %v236
    %v238 = vrot.slane %v233, %v237
    %v240 = vadd.f32 %v231, %v238
    %v241 = vadd.f32 %v232, %v238
    %v242 = vtanh.pop %v240
    %v243 = vtanh.pop %v241
    %v244 = vld [vmem:[%s5] sm:$0x1]
    %v246 = vlaneseq
    %v247 = vshrl.u32 %v246, 7
    %v248 = vsub.s32 0, %v247
    %v249 = vrot.slane %v244, %v248
    %v251 = vmul.f32 %v242, %v249
    %v252 = vmul.f32 %v243, %v249
    %vm253 = vcmask 261120
    %v254 = vsel %vm253, %v251, 0.0
    %255 = vadd.xlane.f32.xlu0 %v254
    %v256 = vpop.xlane.xlu0 %255
    %v257 = vsel %vm253, %v252, 0.0
    %258 = vadd.xlane.f32.xlu0 %v257
    %v259 = vpop.xlane.xlu0 %258
    %v262 = vlaneseq
    %v263 = vand.u32 %v262, 127
    %v264 = vlaneseq
    %v265 = vshrl.u32 %v264, 7
    %v266 = vsub.s32 %v263, %v265
    %v267 = vrot.slane %v256, %v266
    %v268 = vlaneseq
    %v269 = vshrl.u32 %v268, 7
    %v270 = vsub.s32 %v263, %v269
    %v271 = vrot.slane %v259, %v270
    %vm272 = vcmask 1041409
    %v273 = vsel %vm272, %v271, %v267
    %vm275 = vcmask 58368
    %v276 = vsel %vm275, %v273, -inf
    %277 = vmax.xlane.f32.xlu0 %v276
    %v278 = vpop.xlane.xlu0 %277
    %v280 = vlaneseq
    %v281 = vshrl.u32 %v280, 7
    %v282 = vsub.s32 0, %v281
    %v283 = vrot.slane %v278, %v282
    %v284 = vlaneseq
    %v285 = vshrl.u32 %v284, 7
    %v286 = vsub.s32 1, %v285
    %v287 = vrot.slane %v278, %v286
    %v290 = vsub.f32 %v256, %v283
    %v291 = vsub.f32 %v259, %v287
    %v292 = vmul.f32 %v290, 1.442695
    %v293 = vpow.pop %v292
    %v294 = vmul.f32 %v291, 1.442695
    %v295 = vpow.pop %v294
    %298 = vset.pattern.permute.xlu0 0
    %299 = vperm.xlu0 %298, %v293
    %v300 = vpop.permute.xlu0 %299
    %301 = vset.pattern.permute.xlu0 0
    %302 = vperm.xlu0 %301, %v295
    %v303 = vpop.permute.xlu0 %302
    %v304 = vlaneseq
    %v305 = vshrl.u32 %v304, 7
    %v306 = vsub.s32 %v263, %v305
    %v307 = vrot.slane %v300, %v306
    %v308 = vlaneseq
    %v309 = vshrl.u32 %v308, 7
    %v310 = vsub.s32 %v263, %v309
    %v311 = vrot.slane %v303, %v310
    %v312 = vsel %vm272, %v311, %v307
    %v314 = vsel %vm275, %v312, 0.0
    %315 = vadd.xlane.f32.xlu0 %v314
    %v316 = vpop.xlane.xlu0 %315
    %v318 = vlaneseq
    %v319 = vshrl.u32 %v318, 7
    %v320 = vsub.s32 0, %v319
    %v321 = vrot.slane %v316, %v320
    %v322 = vlaneseq
    %v323 = vshrl.u32 %v322, 7
    %v324 = vsub.s32 1, %v323
    %v325 = vrot.slane %v316, %v324
    %v328 = vrcp.pop %v321
    %v329 = vmul.f32 %v293, %v328
    %v330 = vrcp.pop %v325
    %v331 = vmul.f32 %v295, %v330
    %334 = vset.pattern.permute.xlu0 0
    %335 = vperm.xlu0 %334, %v329
    %v336 = vpop.permute.xlu0 %335
    %337 = vset.pattern.permute.xlu0 0
    %338 = vperm.xlu0 %337, %v331
    %v339 = vpop.permute.xlu0 %338
    %v340 = vlaneseq
    %v341 = vshrl.u32 %v340, 7
    %v342 = vsub.s32 %v263, %v341
    %v343 = vrot.slane %v336, %v342
    %v344 = vlaneseq
    %v345 = vshrl.u32 %v344, 7
    %v346 = vsub.s32 %v263, %v345
    %v347 = vrot.slane %v339, %v346
    %v348 = vsel %vm272, %v347, %v343
    %350 = vst.msk [vmem:[#allocation2] sm:$0x3] %vm275, %v348
    // Predicated region
    $region26: #{attention_forward.1} parent=1 // pred_check
      _
    $region27: #{attention_forward.1} parent=1 // pred_check_branch
      %352 = sbr.rel (0) target = $region29
    $region28: #{attention_forward.1} parent=1 // pred_region
      %s354 = ssub.s32 32, 32
      %355 = vsyncadd [#allocation3], %s354
      %s357 = sshll.u32 [#allocation2], 4
      %s358 = int_to_ptr.vmem [resolvable:$true] %s357
      %360 = dma.vmem_to_hbm [thread:$0]  %s358, 32, %s6, [#allocation3]
    $region29: #{attention_forward.1} parent=1 // pred_fallthru
      _
    // Predicated region
    $region30: #{attention_forward.1} parent=1 // pred_check
      _
    $region31: #{attention_forward.1} parent=1 // pred_check_branch
      %362 = sbr.rel (0) target = $region33
    $region32: #{attention_forward.1} parent=1 // pred_region
      %363 = dma.done [#allocation3], 32
    $region33: #{attention_forward.1} parent=1 // pred_fallthru
      _
    %364 = vsyncpa [#allocation3], 1

</llo_original>
